<compile_context>
chip_gen: v7x
topology: tpu7x:2x2x1
jax: 0.10.0
libtpu: 0.0.40
codegen_flags: <defaults>
</compile_context>

<pallas_src>
import functools

import numpy as np
import jax
import jax.numpy as jnp
from jax import lax
from jax.experimental import pallas as pl
from jax.experimental.pallas import tpu as pltpu

NEG_INF = -1e30  # finite mask value: avoids inf - inf -> NaN in the reductions


def _round_up(x, m):
    return (x + m - 1) // m * m


# ----------------------------------------------------------------------------
# Kernel 1: projection (Conv1d kernel_size=1 == linear) + row L2 normalize.
# ----------------------------------------------------------------------------
def _project_kernel(h_ref, w_ref, b_ref, h1_ref):
    h = h_ref[...].astype(jnp.float32)                       # (TM, Fin)
    w = w_ref[...].astype(jnp.float32)                       # (Fin, Fp)
    b = b_ref[...].astype(jnp.float32)                       # (1, Fp)
    hp = jnp.dot(h, w, preferred_element_type=jnp.float32) + b
    norm = jnp.sqrt(jnp.sum(hp * hp, axis=1, keepdims=True))
    h1 = hp / jnp.maximum(norm, 1e-12)                       # F.normalize eps
    h1_ref[...] = h1.astype(h1_ref.dtype)


# ----------------------------------------------------------------------------
# Kernel 2: per-row logsumexp of e = h1 h1^T (flash-style online reduction).
# Symmetry of e turns the dim=0 softmax normalizer into a row-local reduction.
# ----------------------------------------------------------------------------
def _lse_kernel(hq_ref, hk_ref, lse_ref, m_sc, l_sc, *, n_real, n_pad, tk):
    k = pl.program_id(1)

    @pl.when(k == 0)
    def _():
        m_sc[...] = jnp.full_like(m_sc, NEG_INF)
        l_sc[...] = jnp.zeros_like(l_sc)

    # e tile = hq @ hk^T via contraction on last dims (MXU transposed-RHS path).
    s = lax.dot_general(hq_ref[...], hk_ref[...], (((1,), (1,)), ((), ())),
                        preferred_element_type=jnp.float32)  # (TQ, TK) f32
    if n_pad != n_real:  # mask padded key columns
        col = k * tk + lax.broadcasted_iota(jnp.int32, s.shape, 1)
        s = jnp.where(col < n_real, s, NEG_INF)

    m_new = jnp.maximum(m_sc[...], jnp.max(s, axis=1, keepdims=True))
    l_sc[...] = (l_sc[...] * jnp.exp(m_sc[...] - m_new)
                 + jnp.sum(jnp.exp(s - m_new), axis=1, keepdims=True))
    m_sc[...] = m_new

    @pl.when(k == pl.num_programs(1) - 1)
    def _():
        lse_ref[...] = m_sc[...] + jnp.log(l_sc[...])


# ----------------------------------------------------------------------------
# Kernel 3: attention tiles (bf16 out) + att = attention @ h1 + residual + ELU.
# ----------------------------------------------------------------------------
def _attn_out_kernel(hq_ref, hk_ref, lse_ref, attn_ref, out_ref, acc_sc,
                     *, n_real, n_pad, tk):
    k = pl.program_id(1)

    @pl.when(k == 0)
    def _():
        acc_sc[...] = jnp.zeros_like(acc_sc)

    hq = hq_ref[...]                                         # (TQ, Fp) bf16
    hk = hk_ref[...]                                         # (TK, Fp) bf16
    s = lax.dot_general(hq, hk, (((1,), (1,)), ((), ())),
                        preferred_element_type=jnp.float32)  # (TQ, TK) f32
    # attention[i, j] = exp(e[i, j] - lse[j]); columns of attention sum to 1.
    p = jnp.exp(s - lse_ref[...])                            # lse_ref: (1, TK)
    if n_pad != n_real:  # zero contribution of padded keys
        col = k * tk + lax.broadcasted_iota(jnp.int32, p.shape, 1)
        p = jnp.where(col < n_real, p, 0.0)
    pb = p.astype(jnp.bfloat16)
    attn_ref[...] = pb
    acc_sc[...] += jnp.dot(pb, hk, preferred_element_type=jnp.float32)

    @pl.when(k == pl.num_programs(1) - 1)
    def _():
        hout = acc_sc[...] + hq.astype(jnp.float32)          # residual
        # ELU(alpha=1). exp arg clamped to <= 0 so the positive branch never
        # overflows; expm1 is avoided (no guaranteed Mosaic lowering).
        neg = jnp.exp(jnp.minimum(hout, 0.0)) - 1.0
        out_ref[...] = jnp.where(hout > 0, hout, neg)


# ----------------------------------------------------------------------------
# Wrapper
# ----------------------------------------------------------------------------
def gat_forward(h, weight, bias, w_size, h_size):
    """h: (N, Fin); weight: (Fout, Fin) [PyTorch conv weight squeezed];
    bias: (Fout,).  Returns (elu_out (N, Fout), attn (N, N) bf16, heatmap)."""
    N, Fin = h.shape
    Fout = weight.shape[0]
    assert N == w_size * h_size

    # Adaptive tiling: small graphs only pad to 128; large ones use 256 tiles
    # (lane-dense attn writeback, fewer h1 re-reads per key pass).
    T = 128 if N <= 256 else 256
    TQ = TK = T
    Np = _round_up(N, T)
    Fp = _round_up(Fout, 128)               # lane-dense feature axis
    f32 = jnp.float32

    h_p = jnp.zeros((Np, Fin), f32).at[:N, :].set(h.astype(f32))
    w_t = jnp.zeros((Fin, Fp), f32).at[:, :Fout].set(
        jnp.transpose(weight).astype(f32))
    b_p = jnp.zeros((1, Fp), f32).at[0, :Fout].set(bias.astype(f32))

    # --- kernel 1: projection + L2 row-normalize -> h1 (Np, Fp) bf16 --------
    h1 = pl.pallas_call(
        _project_kernel,
        out_shape=jax.ShapeDtypeStruct((Np, Fp), jnp.bfloat16),
        grid=(Np // T,),
        in_specs=[
            pl.BlockSpec((T, Fin), lambda i: (i, 0)),
            pl.BlockSpec((Fin, Fp), lambda i: (0, 0)),
            pl.BlockSpec((1, Fp), lambda i: (0, 0)),
        ],
        out_specs=pl.BlockSpec((T, Fp), lambda i: (i, 0)),
        compiler_params=pltpu.CompilerParams(
            dimension_semantics=("parallel",)),
    )(h_p, w_t, b_p)

    grid = (Np // TQ, Np // TK)
    dims = ("parallel", "arbitrary")        # key/reduction axis trailing

    # --- kernel 2: per-row logsumexp of e (never materializes N x N) --------
    lse_col = pl.pallas_call(
        functools.partial(_lse_kernel, n_real=N, n_pad=Np, tk=TK),
        out_shape=jax.ShapeDtypeStruct((Np, 1), f32),
        grid=grid,
        in_specs=[
            pl.BlockSpec((TQ, Fp), lambda i, k: (i, 0)),
            pl.BlockSpec((TK, Fp), lambda i, k: (k, 0)),
        ],
        out_specs=pl.BlockSpec((TQ, 1), lambda i, k: (i, 0)),
        scratch_shapes=[pltpu.VMEM((TQ, 1), f32),
                        pltpu.VMEM((TQ, 1), f32)],
        compiler_params=pltpu.CompilerParams(dimension_semantics=dims),
    )(h1, h1)

    lse_row = jnp.reshape(lse_col, (1, Np))  # tiny; lane-major for broadcast

    # --- kernel 3: attention tiles (bf16) + att@h1 + residual + ELU ---------
    attn_p, out_p = pl.pallas_call(
        functools.partial(_attn_out_kernel, n_real=N, n_pad=Np, tk=TK),
        out_shape=(jax.ShapeDtypeStruct((Np, Np), jnp.bfloat16),
                   jax.ShapeDtypeStruct((Np, Fp), f32)),
        grid=grid,
        in_specs=[
            pl.BlockSpec((TQ, Fp), lambda i, k: (i, 0)),
            pl.BlockSpec((TK, Fp), lambda i, k: (k, 0)),
            pl.BlockSpec((1, TK), lambda i, k: (0, k)),
        ],
        out_specs=(
            pl.BlockSpec((TQ, TK), lambda i, k: (i, k)),
            pl.BlockSpec((TQ, Fp), lambda i, k: (i, 0)),
        ),
        scratch_shapes=[pltpu.VMEM((TQ, Fp), f32)],
        compiler_params=pltpu.CompilerParams(dimension_semantics=dims),
    )(h1, h1, lse_row)

    out = out_p[:N, :Fout]
    attn = attn_p[:N, :N]

    # Host-side glue: top-5 heatmap per node (same semantics as torch loop:
    # w_index = idx % w_size, h_index = idx // w_size).
    # TODO(synk): the heatmap dict / top-5 bookkeeping stays in JAX+numpy on
    # host; building a Python dict of tuples has no in-kernel equivalent.
    _, top_idx = jax.lax.top_k(jnp.transpose(attn.astype(f32)), 5)  # (N, 5)
    top_idx = np.asarray(jax.device_get(top_idx))
    heatmap = {}
    for i in range(h_size):
        for j in range(w_size):
            kk = i * w_size + j
            heatmap[(i, j)] = [(int(idx % w_size), int(idx // w_size))
                               for idx in top_idx[kk]]
    return out, attn, heatmap


# ----------------------------------------------------------------------------
# Pure-JAX f32 reference (matches the PyTorch forward)
# ----------------------------------------------------------------------------
def _reference(h, weight, bias):
    hi = jax.lax.Precision.HIGHEST
    hp = jnp.matmul(h, weight.T, precision=hi) + bias[None, :]
    nrm = jnp.sqrt(jnp.sum(hp * hp, axis=1, keepdims=True))
    h1 = hp / jnp.maximum(nrm, 1e-12)
    e = jnp.matmul(h1, h1.T, precision=hi)
    attn = jax.nn.softmax(e, axis=0)
    att = jnp.matmul(attn, h1, precision=hi)
    return jax.nn.elu(att + h1), attn


if __name__ == "__main__":
    # Shapes consistent with the module: N = h_size * w_size nodes.
    # N = 400 exercises multi-tile grids on both axes plus key-column masking.
    w_size, h_size = 20, 20
    N = w_size * h_size
    in_features, out_features = 8, 32

    key = jax.random.PRNGKey(0)
    k_h, k_w, k_b = jax.random.split(key, 3)

    h = jax.random.normal(k_h, (N, in_features), dtype=jnp.float32)
    # Conv1d weight (out_features, in_features, 1) squeezed -> (Fout, Fin)
    bound = 1.0 / np.sqrt(in_features)
    weight = jax.random.uniform(
        k_w, (out_features, in_features), jnp.float32, -bound, bound)
    bias = jax.random.uniform(k_b, (out_features,), jnp.float32, -bound, bound)

    out, attn, heatmap = gat_forward(h, weight, bias, w_size, h_size)
    out = jax.block_until_ready(out)
    attn = jax.block_until_ready(attn)

    ref_out, ref_attn = _reference(h, weight, bias)

    assert out.shape == (N, out_features)
    assert attn.shape == (N, N)
    assert len(heatmap) == h_size * w_size
    assert all(len(v) == 5 for v in heatmap.values())
    assert bool(jnp.all(jnp.isfinite(out)))
    # columns of attention sum to 1 (softmax over dim=0); attn stored in bf16
    assert bool(jnp.allclose(jnp.sum(attn.astype(jnp.float32), axis=0),
                             1.0, atol=2e-2))
    assert bool(jnp.allclose(attn.astype(jnp.float32), ref_attn, atol=2e-2))
    assert bool(jnp.allclose(out, ref_out, atol=3e-2, rtol=3e-2))

    print("KERNEL_OK")
</pallas_src>

<mosaic_0001>
module attributes {stable_mosaic.version = 11 : i64} {
  func.func @_project_kernel(%arg0: i32, %arg1: memref<256x8xf32, #tpu.memory_space<vmem>>, %arg2: memref<8x128xf32, #tpu.memory_space<vmem>>, %arg3: memref<1x128xf32, #tpu.memory_space<vmem>>, %arg4: memref<256x128xbf16, #tpu.memory_space<vmem>>) attributes {dimension_semantics = [#tpu.dimension_semantics<parallel>], iteration_bounds = array<i64: 2>, scalar_prefetch = 0 : i64, scratch_operands = 0 : i64, tpu.core_type = #tpu.core_type<tc>, window_params = [{transform_indices = @transform_0, window_bounds = array<i64: 256, 8>}, {pipeline_mode = #tpu.pipeline_mode<synchronous>, transform_indices = @transform_1, window_bounds = array<i64: 8, 128>}, {pipeline_mode = #tpu.pipeline_mode<synchronous>, transform_indices = @transform_2, window_bounds = array<i64: 1, 128>}, {transform_indices = @transform_3, window_bounds = array<i64: 256, 128>}]} {
    %c0 = arith.constant 0 : index
    %c0_0 = arith.constant 0 : index
    %0 = vector.load %arg1[%c0, %c0_0] : memref<256x8xf32, #tpu.memory_space<vmem>>, vector<256x8xf32>
    %c0_1 = arith.constant 0 : index
    %c0_2 = arith.constant 0 : index
    %1 = vector.load %arg2[%c0_1, %c0_2] : memref<8x128xf32, #tpu.memory_space<vmem>>, vector<8x128xf32>
    %c0_3 = arith.constant 0 : index
    %c0_4 = arith.constant 0 : index
    %2 = vector.load %arg3[%c0_3, %c0_4] : memref<1x128xf32, #tpu.memory_space<vmem>>, vector<1x128xf32>
    %cst = arith.constant dense<0.000000e+00> : vector<256x128xf32>
    %3 = tpu.matmul %0, %1, %cst {dimension_numbers = #tpu.dot_dimension_numbers<[1], [0], [0], [1], [0, 0, 1, 1], [], []>} : vector<256x8xf32>, vector<8x128xf32>, vector<256x128xf32> -> vector<256x128xf32>
    %4 = vector.broadcast %2 : vector<1x128xf32> to vector<256x128xf32>
    %5 = arith.addf %3, %4 : vector<256x128xf32>
    %6 = arith.mulf %5, %5 : vector<256x128xf32>
    %cst_5 = arith.constant dense<0.000000e+00> : vector<256xf32>
    %7 = vector.multi_reduction <add>, %6, %cst_5 [1] : vector<256x128xf32> to vector<256xf32>
    %8 = vector.shape_cast %7 : vector<256xf32> to vector<256x1xf32>
    %9 = math.sqrt %8 : vector<256x1xf32>
    %cst_6 = arith.constant 9.99999996E-13 : f32
    %10 = vector.broadcast %cst_6 : f32 to vector<256x1xf32>
    %11 = arith.maximumf %9, %10 : vector<256x1xf32>
    %12 = vector.broadcast %11 : vector<256x1xf32> to vector<256x128xf32>
    %13 = arith.divf %5, %12 : vector<256x128xf32>
    %14 = arith.truncf %13 : vector<256x128xf32> to vector<256x128xbf16>
    %c0_7 = arith.constant 0 : index
    %c0_8 = arith.constant 0 : index
    %15 = vector.load %arg4[%c0_7, %c0_8] : memref<256x128xbf16, #tpu.memory_space<vmem>>, vector<256x128xbf16>
    tpu.vector_store %arg4[%c0_7, %c0_8], %14 {strides = array<i32>} : memref<256x128xbf16, #tpu.memory_space<vmem>>, vector<256x128xbf16>,
    return
  }
  func.func @transform_0(%arg0: i32) -> (i32, i32) {
    %c0_i32 = arith.constant 0 : i32
    %c0_i32_0 = arith.constant 0 : i32
    return %arg0, %c0_i32 : i32, i32
  }
  func.func @transform_1(%arg0: i32) -> (i32, i32) {
    %c0_i32 = arith.constant 0 : i32
    %c0_i32_0 = arith.constant 0 : i32
    %c0_i32_1 = arith.constant 0 : i32
    return %c0_i32, %c0_i32_0 : i32, i32
  }
  func.func @transform_2(%arg0: i32) -> (i32, i32) {
    %c0_i32 = arith.constant 0 : i32
    %c0_i32_0 = arith.constant 0 : i32
    %c0_i32_1 = arith.constant 0 : i32
    return %c0_i32, %c0_i32_0 : i32, i32
  }
  func.func @transform_3(%arg0: i32) -> (i32, i32) {
    %c0_i32 = arith.constant 0 : i32
    %c0_i32_0 = arith.constant 0 : i32
    return %arg0, %c0_i32 : i32, i32
  }
}

</mosaic_0001>

<llo_original>
// kernel: tpu_custom_call.1
$region0: #{tpu_custom_call.1}
  #allocation0 [shape = 'u32[]', space=smem, size = 0x4, offset = 0x4, fixed_abs, tag = 'smem constant byte address 0x4 - core index']
  #allocation1 [shape = 'u32[144,128]{1,0:T(1,128)}', space=vmem, size = 0x12000, scoped, tag = 'internal scratch']
  %s0 = inlined_call_operand.vmem [shape: f32[512,8], index: 0, kind: input, shape index: {}]
  %s1 = inlined_call_operand.vmem [shape: f32[8,128], index: 1, kind: input, shape index: {}]
  %s2 = inlined_call_operand.vmem [shape: f32[1,128], index: 2, kind: input, shape index: {}]
  %s3 = inlined_call_operand.hbm [shape: bf16[512,128], index: 3, kind: output, shape index: {}]
  %s4 = sld [smem:[#allocation0]]
  $region45: #{tpu_custom_call.1} parent=0
    _
  %s6 = ssub.s32 1, %s4
  %s7 = scalar_select 0, %s6, %s4
  $region1: #{tpu_custom_call.1} parent=0
    #allocation2 [shape = 'u8[131072]{0}', space=vmem, size = 0x20000, scoped, tag = 'output window, operand 0']
    #allocation3 [shape = 's32[2]{0}', space=sflag, size = 0x8, scoped, tag = 'scoped memory for tpu_custom_call.1']
    %8 = vsyncpa [#allocation3], 0
    %s9 = scalar_lea.sflag [#allocation3], 1
    %10 = vsyncpa %s9, 0
    loop: start=0, step=1, limit=4
    $region2: #{tpu_custom_call.1} parent=1 // loop_pre_header
      _
    $region3: #{tpu_custom_call.1} parent=1 // loop_header
      %s12 = sphi 0, %s16
      %p13 = scmp.ge.s32.totalorder %s12, 4
      %s22 = sphi 0, %s24
      %s25 = sphi 0, %s22
      %s26 = sphi 0, %s25
      %s42 = sphi 0, %s26
      %s46 = sphi 0, %s46
      %s48 = sphi 0, %s46
      %s49 = sphi 0, %s48
      %s63 = sphi 0, %s49
      %s67 = sphi 0, %s67
      %s69 = sphi 0, %s67
      %s70 = sphi 0, %s69
      %s84 = sphi 0, %s70
      %s90 = sphi 0, %s92
      %s93 = sphi 0, %s90
      %s94 = sphi 0, %s93
      %s110 = sphi 0, %s94
    $region4: #{tpu_custom_call.1} parent=1 // loop_header_branch
      %15 = sbr.rel (%p13) target = $region8
    $region5: #{tpu_custom_call.1} parent=1 // loop_body
      %s17 = ssub.s32 %s12, 1
      %s18 = ssub.s32 %s12, 2
      %s19 = sadd.s32 %s12, 1
      %s20 = ssub.s32 %s12, %s19
      %p21 = scmp.eq.s32.totalorder %s20, 0
      %s23 = sadd.s32 %s22, 1
      %s24 = scalar_select %p21, %s22, %s23
      %p27 = pneg %p21
      %p28 = scmp.eq.s32.totalorder %s12, 1
      %p29 = por %p27, %p28
      %p30 = scmp.ne.s32.totalorder %s22, %s25
      %p31 = scmp.eq.s32.totalorder %s12, 0
      %p32 = por %p30, %p31
      %p33 = scmp.ne.s32.totalorder %s22, %s25
      %p34 = scmp.eq.s32.totalorder %s17, 1
      %p35 = por %p33, %p34
      %p36 = scmp.ne.s32.totalorder %s25, %s26
      %p37 = scmp.eq.s32.totalorder %s17, 0
      %p38 = por %p36, %p37
      %p39 = scmp.ne.s32.totalorder %s25, %s26
      %p40 = scmp.eq.s32.totalorder %s18, 1
      %p41 = por %p39, %p40
      %p43 = scmp.ne.s32.totalorder %s26, %s42
      %p44 = scmp.eq.s32.totalorder %s18, 0
      %p45 = por %p43, %p44
      %s47 = sadd.s32 %s46, 1
      %p50 = scmp.eq.s32.totalorder %s12, 1
      %p51 = scmp.ne.s32.totalorder %s46, %s48
      %p52 = scmp.eq.s32.totalorder %s12, 0
      %p53 = por %p51, %p52
      %p54 = scmp.ne.s32.totalorder %s46, %s48
      %p55 = scmp.eq.s32.totalorder %s17, 1
      %p56 = por %p54, %p55
      %p57 = scmp.ne.s32.totalorder %s48, %s49
      %p58 = scmp.eq.s32.totalorder %s17, 0
      %p59 = por %p57, %p58
      %p60 = scmp.ne.s32.totalorder %s48, %s49
      %p61 = scmp.eq.s32.totalorder %s18, 1
      %p62 = por %p60, %p61
      %p64 = scmp.ne.s32.totalorder %s49, %s63
      %p65 = scmp.eq.s32.totalorder %s18, 0
      %p66 = por %p64, %p65
      %s68 = sadd.s32 %s67, 1
      %p71 = scmp.eq.s32.totalorder %s12, 1
      %p72 = scmp.ne.s32.totalorder %s67, %s69
      %p73 = scmp.eq.s32.totalorder %s12, 0
      %p74 = por %p72, %p73
      %p75 = scmp.ne.s32.totalorder %s67, %s69
      %p76 = scmp.eq.s32.totalorder %s17, 1
      %p77 = por %p75, %p76
      %p78 = scmp.ne.s32.totalorder %s69, %s70
      %p79 = scmp.eq.s32.totalorder %s17, 0
      %p80 = por %p78, %p79
      %p81 = scmp.ne.s32.totalorder %s69, %s70
      %p82 = scmp.eq.s32.totalorder %s18, 1
      %p83 = por %p81, %p82
      %p85 = scmp.ne.s32.totalorder %s70, %s84
      %p86 = scmp.eq.s32.totalorder %s18, 0
      %p87 = por %p85, %p86
      %s88 = ssub.s32 %s12, %s19
      %p89 = scmp.eq.s32.totalorder %s88, 0
      %s91 = sadd.s32 %s90, 1
      %s92 = scalar_select %p89, %s90, %s91
      %p95 = pneg %p89
      %p96 = scmp.eq.s32.totalorder %s12, 1
      %p97 = por %p95, %p96
      %p98 = scmp.ne.s32.totalorder %s90, %s93
      %p99 = scmp.eq.s32.totalorder %s12, 0
      %p100 = por %p98, %p99
      %p101 = scmp.ne.s32.totalorder %s90, %s93
      %p102 = scmp.eq.s32.totalorder %s17, 1
      %p103 = por %p101, %p102
      %p104 = scmp.ne.s32.totalorder %s93, %s94
      %p105 = scmp.eq.s32.totalorder %s17, 0
      %p106 = por %p104, %p105
      %p107 = scmp.ne.s32.totalorder %s93, %s94
      %p108 = scmp.eq.s32.totalorder %s18, 1
      %p109 = por %p107, %p108
      %p111 = scmp.ne.s32.totalorder %s94, %s110
      %p112 = scmp.eq.s32.totalorder %s18, 0
      %p113 = por %p111, %p112
      %p114 = scmp.le.s32.totalorder 1, %s12
      %p115 = scmp.lt.s32.totalorder %s12, 3
      %p116 = pnand %p114, %p115
      %p117 = pneg %p116
      // Predicated region
      $region9: #{tpu_custom_call.1} parent=5 // pred_check
        _
      $region10: #{tpu_custom_call.1} parent=5 // pred_check_branch
        %119 = sbr.rel (%p116) target = $region12
      $region11: #{tpu_custom_call.1} parent=5 // pred_region
        %s120 = ssub.s32 %s12, 1
        // Predicated region
        $region13: #{tpu_custom_call.1} parent=11 // pred_check
          %p121 = pneg %p59
        $region14: #{tpu_custom_call.1} parent=11 // pred_check_branch
          %123 = sbr.rel (%p121) target = $region16
        $region15: #{tpu_custom_call.1} parent=11 // pred_region
          _
        $region16: #{tpu_custom_call.1} parent=11 // pred_fallthru
          _
        // Predicated region
        $region17: #{tpu_custom_call.1} parent=11 // pred_check
          %p124 = pneg %p80
        $region18: #{tpu_custom_call.1} parent=11 // pred_check_branch
          %126 = sbr.rel (%p124) target = $region20
        $region19: #{tpu_custom_call.1} parent=11 // pred_region
          _
        $region20: #{tpu_custom_call.1} parent=11 // pred_fallthru
          _
      $region12: #{tpu_custom_call.1} parent=5 // pred_fallthru
        _
      %p127 = scmp.lt.s32.totalorder %s12, 2
      // Predicated region
      $region21: #{tpu_custom_call.1} parent=5 // pred_check
        %p128 = pneg %p127
      $region22: #{tpu_custom_call.1} parent=5 // pred_check_branch
        %130 = sbr.rel (%p128) target = $region24
      $region23: #{tpu_custom_call.1} parent=5 // pred_region
        // Predicated region
        $region25: #{tpu_custom_call.1} parent=23 // pred_check
          %p131 = pneg %p32
        $region26: #{tpu_custom_call.1} parent=23 // pred_check_branch
          %133 = sbr.rel (%p131) target = $region28
        $region27: #{tpu_custom_call.1} parent=23 // pred_region
          %s134 = smul.u32 32, %s12
          %p135 = scmp.lt.s32.totalorder %s134, 63
          %s136 = scalar_select %p135, %s134, 63
          %s137 = smul.addr %s136, 8
          %s138 = scalar_lea.vmem %s0, %s137
          %s139 = smul.u32 32, %s12
        $region28: #{tpu_custom_call.1} parent=23 // pred_fallthru
          _
      $region24: #{tpu_custom_call.1} parent=5 // pred_fallthru
        _
      %p140 = scmp.le.s32.totalorder 1, %s12
      %p141 = scmp.lt.s32.totalorder %s12, 3
      %p142 = pnand %p140, %p141
      %p143 = pneg %p142
      // Predicated region
      $region29: #{tpu_custom_call.1} parent=5 // pred_check
        _
      $region30: #{tpu_custom_call.1} parent=5 // pred_check_branch
        %145 = sbr.rel (%p142) target = $region32
      $region31: #{tpu_custom_call.1} parent=5 // pred_region
        %s146 = ssub.s32 %s12, 1
        %s147 = smul.u32 32, %s17
        %p148 = scmp.lt.s32.totalorder %s147, 63
        %s149 = scalar_select %p148, %s147, 63
        %s150 = smul.addr %s149, 8
        %s151 = scalar_lea.vmem %s0, %s150
        %p152 = pneg %p38
        %p153 = pneg %p35
        %p154 = pneg %p59
        %p155 = pneg %p56
        %p156 = pneg %p80
        %p157 = pneg %p77
        %p158 = pneg %p106
        %p159 = pneg %p103
        %s160 = sand.u32 %s93, 1
        %s161 = scalar_lea.sflag [#allocation3], %s160
        %s162 = sand.u32 %s93, 1
        %s163 = smul.addr %s162, 128
        %s164 = scalar_lea.vmem [#allocation2], %s163
        %s165 = smul.u32 32, %s17
        %p166 = scmp.lt.s32.totalorder %s165, 63
        %s167 = scalar_select %p166, %s165, 63
        %s168 = smul.addr %s167, 8
        %s169 = scalar_lea.vmem %s0, %s168
        %s170 = smul.u32 32, %s17
        %s171 = smul.u32 32, %s17
        %v172 = vld [vmem:[%s169] sm:$0xff]
        %v173 = vld [vmem:[%s169 + $0x8] sm:$0xff]
        %v174 = vld [vmem:[%s169 + $0x10] sm:$0xff]
        %v175 = vld [vmem:[%s169 + $0x18] sm:$0xff]
        %v176 = vld [vmem:[%s169 + $0x20] sm:$0xff]
        %v177 = vld [vmem:[%s169 + $0x28] sm:$0xff]
        %v178 = vld [vmem:[%s169 + $0x30] sm:$0xff]
        %v179 = vld [vmem:[%s169 + $0x38] sm:$0xff]
        %v180 = vld [vmem:[%s169 + $0x40] sm:$0xff]
        %v181 = vld [vmem:[%s169 + $0x48] sm:$0xff]
        %v182 = vld [vmem:[%s169 + $0x50] sm:$0xff]
        %v183 = vld [vmem:[%s169 + $0x58] sm:$0xff]
        %v184 = vld [vmem:[%s169 + $0x60] sm:$0xff]
        %v185 = vld [vmem:[%s169 + $0x68] sm:$0xff]
        %v186 = vld [vmem:[%s169 + $0x70] sm:$0xff]
        %v187 = vld [vmem:[%s169 + $0x78] sm:$0xff]
        %v188 = vld [vmem:[%s169 + $0x80] sm:$0xff]
        %v189 = vld [vmem:[%s169 + $0x88] sm:$0xff]
        %v190 = vld [vmem:[%s169 + $0x90] sm:$0xff]
        %v191 = vld [vmem:[%s169 + $0x98] sm:$0xff]
        %v192 = vld [vmem:[%s169 + $0xa0] sm:$0xff]
        %v193 = vld [vmem:[%s169 + $0xa8] sm:$0xff]
        %v194 = vld [vmem:[%s169 + $0xb0] sm:$0xff]
        %v195 = vld [vmem:[%s169 + $0xb8] sm:$0xff]
        %v196 = vld [vmem:[%s169 + $0xc0] sm:$0xff]
        %v197 = vld [vmem:[%s169 + $0xc8] sm:$0xff]
        %v198 = vld [vmem:[%s169 + $0xd0] sm:$0xff]
        %v199 = vld [vmem:[%s169 + $0xd8] sm:$0xff]
        %v200 = vld [vmem:[%s169 + $0xe0] sm:$0xff]
        %v201 = vld [vmem:[%s169 + $0xe8] sm:$0xff]
        %v202 = vld [vmem:[%s169 + $0xf0] sm:$0xff]
        %v203 = vld [vmem:[%s169 + $0xf8] sm:$0xff]
        %v204 = vld [vmem:[%s1] sm:$0xff]
        %v205 = vld [vmem:[%s2] sm:$0x1]
        %v207 = vlaneseq
        %v208 = vshrl.u32 %v207, 7
        %v209 = vsub.s32 0, %v208
        %v210 = vrot.slane %v205, %v209
        %vm212 = vcmask 64512
        %v214 = vsel %vm212, %v172, 0
        %v217 = vsel %vm212, %v173, 0
        %v220 = vsel %vm212, %v174, 0
        %v223 = vsel %vm212, %v175, 0
        %v226 = vsel %vm212, %v176, 0
        %v229 = vsel %vm212, %v177, 0
        %v232 = vsel %vm212, %v178, 0
        %v235 = vsel %vm212, %v179, 0
        %v238 = vsel %vm212, %v180, 0
        %v241 = vsel %vm212, %v181, 0
        %v244 = vsel %vm212, %v182, 0
        %v247 = vsel %vm212, %v183, 0
        %v250 = vsel %vm212, %v184, 0
        %v253 = vsel %vm212, %v185, 0
        %v256 = vsel %vm212, %v186, 0
        %v259 = vsel %vm212, %v187, 0
        %v262 = vsel %vm212, %v188, 0
        %v265 = vsel %vm212, %v189, 0
        %v268 = vsel %vm212, %v190, 0
        %v271 = vsel %vm212, %v191, 0
        %v274 = vsel %vm212, %v192, 0
        %v277 = vsel %vm212, %v193, 0
        %v280 = vsel %vm212, %v194, 0
        %v283 = vsel %vm212, %v195, 0
        %v286 = vsel %vm212, %v196, 0
        %v289 = vsel %vm212, %v197, 0
        %v292 = vsel %vm212, %v198, 0
        %v295 = vsel %vm212, %v199, 0
        %v298 = vsel %vm212, %v200, 0
        %v301 = vsel %vm212, %v201, 0
        %v304 = vsel %vm212, %v202, 0
        %v307 = vsel %vm212, %v203, 0
        %309 = vmatprep.subr.mxu0 0.0
        %310 = vmatpush1.msra.mxu0 %v204
        %311 = vmatprep.subr.mxu0 0.0
        %312 = vmatpush1.msra.mxu0 0.0
        %313 = vmatprep.subr.mxu0 0.0
        %314 = vmatpush1.msra.mxu0 0.0
        %315 = vmatprep.subr.mxu0 0.0
        %316 = vmatpush1.msra.mxu0 0.0
        %317 = vmatprep.subr.mxu0 0.0
        %318 = vmatpush1.msra.mxu0 0.0
        %319 = vmatprep.subr.mxu0 0.0
        %320 = vmatpush1.msra.mxu0 0.0
        %321 = vmatprep.subr.mxu0 0.0
        %322 = vmatpush1.msra.mxu0 0.0
        %323 = vmatprep.subr.mxu0 0.0
        %324 = vmatpush1.msra.mxu0 0.0
        %325 = vmatprep.subr.mxu0 0.0
        %326 = vmatpush1.msra.mxu0 0.0
        %327 = vmatprep.subr.mxu0 0.0
        %328 = vmatpush1.msra.mxu0 0.0
        %329 = vmatprep.subr.mxu0 0.0
        %330 = vmatpush1.msra.mxu0 0.0
        %331 = vmatprep.subr.mxu0 0.0
        %332 = vmatpush1.msra.mxu0 0.0
        %333 = vmatprep.subr.mxu0 0.0
        %334 = vmatpush1.msra.mxu0 0.0
        %335 = vmatprep.subr.mxu0 0.0
        %336 = vmatpush1.msra.mxu0 0.0
        %337 = vmatprep.subr.mxu0 0.0
        %338 = vmatpush1.msra.mxu0 0.0
        %339 = vmatprep.subr.mxu0 0.0
        %340 = vmatpush1.msra.mxu0 0.0
        %341 = vmatprep.subr.mxu0 0.0
        %342 = vmatpush1.msra.mxu0 0.0
        %343 = vmatprep.subr.mxu0 0.0
        %344 = vmatpush1.msra.mxu0 0.0
        %345 = vmatprep.subr.mxu0 0.0
        %346 = vmatpush1.msra.mxu0 0.0
        %347 = vmatprep.subr.mxu0 0.0
        %348 = vmatpush1.msra.mxu0 0.0
        %349 = vmatprep.subr.mxu0 0.0
        %350 = vmatpush1.msra.mxu0 0.0
        %351 = vmatprep.subr.mxu0 0.0
        %352 = vmatpush1.msra.mxu0 0.0
        %353 = vmatprep.subr.mxu0 0.0
        %354 = vmatpush1.msra.mxu0 0.0
        %355 = vmatprep.subr.mxu0 0.0
        %356 = vmatpush1.msra.mxu0 0.0
        %357 = vmatprep.subr.mxu0 0.0
        %358 = vmatpush1.msra.mxu0 0.0
        %359 = vmatprep.subr.mxu0 0.0
        %360 = vmatpush1.msra.mxu0 0.0
        %361 = vmatprep.subr.mxu0 0.0
        %362 = vmatpush1.msra.mxu0 0.0
        %363 = vmatprep.subr.mxu0 0.0
        %364 = vmatpush1.msra.mxu0 0.0
        %365 = vmatprep.subr.mxu0 0.0
        %366 = vmatpush1.msra.mxu0 0.0
        %367 = vmatprep.subr.mxu0 0.0
        %368 = vmatpush1.msra.mxu0 0.0
        %369 = vmatprep.subr.mxu0 0.0
        %370 = vmatpush1.msra.mxu0 0.0
        %371 = vmatprep.subr.mxu0 0.0
        %372 = vmatpush1.msra.mxu0 0.0
        %373 = vmatprep.mubr.f32.mxu0 0.0
        %374 = vmatmul.mubr.f32.gmra.mrb[0].mxu0 %v214
        %v375 = vpop.f32.mrb[0].mxu0
        %v376 = vadd.f32 %v210, %v375
        %v377 = vpop.f32.mrb[0].mxu0
        %378 = vmatprep.mubr.f32.mxu0 0.0
        %379 = vmatmul.mubr.f32.gmra.mrb[0].mxu0 %v217
        %v380 = vpop.f32.mrb[0].mxu0
        %v381 = vadd.f32 %v210, %v380
        %v382 = vpop.f32.mrb[0].mxu0
        %383 = vmatprep.mubr.f32.mxu0 0.0
        %384 = vmatmul.mubr.f32.gmra.mrb[0].mxu0 %v220
        %v385 = vpop.f32.mrb[0].mxu0
        %v386 = vadd.f32 %v210, %v385
        %v387 = vpop.f32.mrb[0].mxu0
        %388 = vmatprep.mubr.f32.mxu0 0.0
        %389 = vmatmul.mubr.f32.gmra.mrb[0].mxu0 %v223
        %v390 = vpop.f32.mrb[0].mxu0
        %v391 = vadd.f32 %v210, %v390
        %v392 = vpop.f32.mrb[0].mxu0
        %393 = vmatprep.mubr.f32.mxu0 0.0
        %394 = vmatmul.mubr.f32.gmra.mrb[0].mxu0 %v226
        %v395 = vpop.f32.mrb[0].mxu0
        %v396 = vadd.f32 %v210, %v395
        %v397 = vpop.f32.mrb[0].mxu0
        %398 = vmatprep.mubr.f32.mxu0 0.0
        %399 = vmatmul.mubr.f32.gmra.mrb[0].mxu0 %v229
        %v400 = vpop.f32.mrb[0].mxu0
        %v401 = vadd.f32 %v210, %v400
        %v402 = vpop.f32.mrb[0].mxu0
        %403 = vmatprep.mubr.f32.mxu0 0.0
        %404 = vmatmul.mubr.f32.gmra.mrb[0].mxu0 %v232
        %v405 = vpop.f32.mrb[0].mxu0
        %v406 = vadd.f32 %v210, %v405
        %v407 = vpop.f32.mrb[0].mxu0
        %408 = vmatprep.mubr.f32.mxu0 0.0
        %409 = vmatmul.mubr.f32.gmra.mrb[0].mxu0 %v235
        %v410 = vpop.f32.mrb[0].mxu0
        %v411 = vadd.f32 %v210, %v410
        %v412 = vpop.f32.mrb[0].mxu0
        %413 = vmatprep.mubr.f32.mxu0 0.0
        %414 = vmatmul.mubr.f32.gmra.mrb[0].mxu0 %v238
        %v415 = vpop.f32.mrb[0].mxu0
        %v416 = vadd.f32 %v210, %v415
        %v417 = vpop.f32.mrb[0].mxu0
        %418 = vmatprep.mubr.f32.mxu0 0.0
        %419 = vmatmul.mubr.f32.gmra.mrb[0].mxu0 %v241
        %v420 = vpop.f32.mrb[0].mxu0
        %v421 = vadd.f32 %v210, %v420
        %v422 = vpop.f32.mrb[0].mxu0
        %423 = vmatprep.mubr.f32.mxu0 0.0
        %424 = vmatmul.mubr.f32.gmra.mrb[0].mxu0 %v244
        %v425 = vpop.f32.mrb[0].mxu0
        %v426 = vadd.f32 %v210, %v425
        %v427 = vpop.f32.mrb[0].mxu0
        %428 = vmatprep.mubr.f32.mxu0 0.0
        %429 = vmatmul.mubr.f32.gmra.mrb[0].mxu0 %v247
        %v430 = vpop.f32.mrb[0].mxu0
        %v431 = vadd.f32 %v210, %v430
        %v432 = vpop.f32.mrb[0].mxu0
        %433 = vmatprep.mubr.f32.mxu0 0.0
        %434 = vmatmul.mubr.f32.gmra.mrb[0].mxu0 %v250
        %v435 = vpop.f32.mrb[0].mxu0
        %v436 = vadd.f32 %v210, %v435
        %v437 = vpop.f32.mrb[0].mxu0
        %438 = vmatprep.mubr.f32.mxu0 0.0
        %439 = vmatmul.mubr.f32.gmra.mrb[0].mxu0 %v253
        %v440 = vpop.f32.mrb[0].mxu0
        %v441 = vadd.f32 %v210, %v440
        %v442 = vpop.f32.mrb[0].mxu0
        %443 = vmatprep.mubr.f32.mxu0 0.0
        %444 = vmatmul.mubr.f32.gmra.mrb[0].mxu0 %v256
        %v445 = vpop.f32.mrb[0].mxu0
        %v446 = vadd.f32 %v210, %v445
        %v447 = vpop.f32.mrb[0].mxu0
        %448 = vmatprep.mubr.f32.mxu0 0.0
        %449 = vmatmul.mubr.f32.gmra.mrb[0].mxu0 %v259
        %v450 = vpop.f32.mrb[0].mxu0
        %v451 = vadd.f32 %v210, %v450
        %v452 = vpop.f32.mrb[0].mxu0
        %453 = vmatprep.mubr.f32.mxu0 0.0
        %454 = vmatmul.mubr.f32.gmra.mrb[0].mxu0 %v262
        %v455 = vpop.f32.mrb[0].mxu0
        %v456 = vadd.f32 %v210, %v455
        %v457 = vpop.f32.mrb[0].mxu0
        %458 = vmatprep.mubr.f32.mxu0 0.0
        %459 = vmatmul.mubr.f32.gmra.mrb[0].mxu0 %v265
        %v460 = vpop.f32.mrb[0].mxu0
        %v461 = vadd.f32 %v210, %v460
        %v462 = vpop.f32.mrb[0].mxu0
        %463 = vmatprep.mubr.f32.mxu0 0.0
        %464 = vmatmul.mubr.f32.gmra.mrb[0].mxu0 %v268
        %v465 = vpop.f32.mrb[0].mxu0
        %v466 = vadd.f32 %v210, %v465
        %v467 = vpop.f32.mrb[0].mxu0
        %468 = vmatprep.mubr.f32.mxu0 0.0
        %469 = vmatmul.mubr.f32.gmra.mrb[0].mxu0 %v271
        %v470 = vpop.f32.mrb[0].mxu0
        %v471 = vadd.f32 %v210, %v470
        %v472 = vpop.f32.mrb[0].mxu0
        %473 = vmatprep.mubr.f32.mxu0 0.0
        %474 = vmatmul.mubr.f32.gmra.mrb[0].mxu0 %v274
        %v475 = vpop.f32.mrb[0].mxu0
        %v476 = vadd.f32 %v210, %v475
        %v477 = vpop.f32.mrb[0].mxu0
        %478 = vmatprep.mubr.f32.mxu0 0.0
        %479 = vmatmul.mubr.f32.gmra.mrb[0].mxu0 %v277
        %v480 = vpop.f32.mrb[0].mxu0
        %v481 = vadd.f32 %v210, %v480
        %v482 = vpop.f32.mrb[0].mxu0
        %483 = vmatprep.mubr.f32.mxu0 0.0
        %484 = vmatmul.mubr.f32.gmra.mrb[0].mxu0 %v280
        %v485 = vpop.f32.mrb[0].mxu0
        %v486 = vadd.f32 %v210, %v485
        %v487 = vpop.f32.mrb[0].mxu0
        %488 = vmatprep.mubr.f32.mxu0 0.0
        %489 = vmatmul.mubr.f32.gmra.mrb[0].mxu0 %v283
        %v490 = vpop.f32.mrb[0].mxu0
        %v491 = vadd.f32 %v210, %v490
        %v492 = vpop.f32.mrb[0].mxu0
        %493 = vmatprep.mubr.f32.mxu0 0.0
        %494 = vmatmul.mubr.f32.gmra.mrb[0].mxu0 %v286
        %v495 = vpop.f32.mrb[0].mxu0
        %v496 = vadd.f32 %v210, %v495
        %v497 = vpop.f32.mrb[0].mxu0
        %498 = vmatprep.mubr.f32.mxu0 0.0
        %499 = vmatmul.mubr.f32.gmra.mrb[0].mxu0 %v289
        %v500 = vpop.f32.mrb[0].mxu0
        %v501 = vadd.f32 %v210, %v500
        %v502 = vpop.f32.mrb[0].mxu0
        %503 = vmatprep.mubr.f32.mxu0 0.0
        %504 = vmatmul.mubr.f32.gmra.mrb[0].mxu0 %v292
        %v505 = vpop.f32.mrb[0].mxu0
        %v506 = vadd.f32 %v210, %v505
        %v507 = vpop.f32.mrb[0].mxu0
        %508 = vmatprep.mubr.f32.mxu0 0.0
        %509 = vmatmul.mubr.f32.gmra.mrb[0].mxu0 %v295
        %v510 = vpop.f32.mrb[0].mxu0
        %v511 = vadd.f32 %v210, %v510
        %v512 = vpop.f32.mrb[0].mxu0
        %513 = vmatprep.mubr.f32.mxu0 0.0
        %514 = vmatmul.mubr.f32.gmra.mrb[0].mxu0 %v298
        %v515 = vpop.f32.mrb[0].mxu0
        %v516 = vadd.f32 %v210, %v515
        %v517 = vpop.f32.mrb[0].mxu0
        %518 = vmatprep.mubr.f32.mxu0 0.0
        %519 = vmatmul.mubr.f32.gmra.mrb[0].mxu0 %v301
        %v520 = vpop.f32.mrb[0].mxu0
        %v521 = vadd.f32 %v210, %v520
        %v522 = vpop.f32.mrb[0].mxu0
        %523 = vmatprep.mubr.f32.mxu0 0.0
        %524 = vmatmul.mubr.f32.gmra.mrb[0].mxu0 %v304
        %v525 = vpop.f32.mrb[0].mxu0
        %v526 = vadd.f32 %v210, %v525
        %v527 = vpop.f32.mrb[0].mxu0
        %528 = vmatprep.mubr.f32.mxu0 0.0
        %529 = vmatmul.mubr.f32.gmra.mrb[0].mxu0 %v307
        %v530 = vpop.f32.mrb[0].mxu0
        %v531 = vadd.f32 %v210, %v530
        %v532 = vpop.f32.mrb[0].mxu0
        %533 = vdwg.mxu0
        %v534 = vmul.f32 %v376, %v376
        %v535 = vmul.f32 %v381, %v381
        %v536 = vmul.f32 %v386, %v386
        %v537 = vmul.f32 %v391, %v391
        %v538 = vmul.f32 %v396, %v396
        %v539 = vmul.f32 %v401, %v401
        %v540 = vmul.f32 %v406, %v406
        %v541 = vmul.f32 %v411, %v411
        %v542 = vmul.f32 %v416, %v416
        %v543 = vmul.f32 %v421, %v421
        %v544 = vmul.f32 %v426, %v426
        %v545 = vmul.f32 %v431, %v431
        %v546 = vmul.f32 %v436, %v436
        %v547 = vmul.f32 %v441, %v441
        %v548 = vmul.f32 %v446, %v446
        %v549 = vmul.f32 %v451, %v451
        %v550 = vmul.f32 %v456, %v456
        %v551 = vmul.f32 %v461, %v461
        %v552 = vmul.f32 %v466, %v466
        %v553 = vmul.f32 %v471, %v471
        %v554 = vmul.f32 %v476, %v476
        %v555 = vmul.f32 %v481, %v481
        %v556 = vmul.f32 %v486, %v486
        %v557 = vmul.f32 %v491, %v491
        %v558 = vmul.f32 %v496, %v496
        %v559 = vmul.f32 %v501, %v501
        %v560 = vmul.f32 %v506, %v506
        %v561 = vmul.f32 %v511, %v511
        %v562 = vmul.f32 %v516, %v516
        %v563 = vmul.f32 %v521, %v521
        %v564 = vmul.f32 %v526, %v526
        %v565 = vmul.f32 %v531, %v531
        %566 = vadd.xlane.f32.xlu0 %v534
        %v567 = vpop.xlane.xlu0 %566
        %568 = vadd.xlane.f32.xlu0 %v535
        %v569 = vpop.xlane.xlu0 %568
        %570 = vadd.xlane.f32.xlu0 %v536
        %v571 = vpop.xlane.xlu0 %570
        %572 = vadd.xlane.f32.xlu0 %v537
        %v573 = vpop.xlane.xlu0 %572
        %574 = vadd.xlane.f32.xlu0 %v538
        %v575 = vpop.xlane.xlu0 %574
        %576 = vadd.xlane.f32.xlu0 %v539
        %v577 = vpop.xlane.xlu0 %576
        %578 = vadd.xlane.f32.xlu0 %v540
        %v579 = vpop.xlane.xlu0 %578
        %580 = vadd.xlane.f32.xlu0 %v541
        %v581 = vpop.xlane.xlu0 %580
        %582 = vadd.xlane.f32.xlu0 %v542
        %v583 = vpop.xlane.xlu0 %582
        %584 = vadd.xlane.f32.xlu0 %v543
        %v585 = vpop.xlane.xlu0 %584
        %586 = vadd.xlane.f32.xlu0 %v544
        %v587 = vpop.xlane.xlu0 %586
        %588 = vadd.xlane.f32.xlu0 %v545
        %v589 = vpop.xlane.xlu0 %588
        %590 = vadd.xlane.f32.xlu0 %v546
        %v591 = vpop.xlane.xlu0 %590
        %592 = vadd.xlane.f32.xlu0 %v547
        %v593 = vpop.xlane.xlu0 %592
        %594 = vadd.xlane.f32.xlu0 %v548
        %v595 = vpop.xlane.xlu0 %594
        %596 = vadd.xlane.f32.xlu0 %v549
        %v597 = vpop.xlane.xlu0 %596
        %598 = vadd.xlane.f32.xlu0 %v550
        %v599 = vpop.xlane.xlu0 %598
        %600 = vadd.xlane.f32.xlu0 %v551
        %v601 = vpop.xlane.xlu0 %600
        %602 = vadd.xlane.f32.xlu0 %v552
        %v603 = vpop.xlane.xlu0 %602
        %604 = vadd.xlane.f32.xlu0 %v553
        %v605 = vpop.xlane.xlu0 %604
        %606 = vadd.xlane.f32.xlu0 %v554
        %v607 = vpop.xlane.xlu0 %606
        %608 = vadd.xlane.f32.xlu0 %v555
        %v609 = vpop.xlane.xlu0 %608
        %610 = vadd.xlane.f32.xlu0 %v556
        %v611 = vpop.xlane.xlu0 %610
        %612 = vadd.xlane.f32.xlu0 %v557
        %v613 = vpop.xlane.xlu0 %612
        %614 = vadd.xlane.f32.xlu0 %v558
        %v615 = vpop.xlane.xlu0 %614
        %616 = vadd.xlane.f32.xlu0 %v559
        %v617 = vpop.xlane.xlu0 %616
        %618 = vadd.xlane.f32.xlu0 %v560
        %v619 = vpop.xlane.xlu0 %618
        %620 = vadd.xlane.f32.xlu0 %v561
        %v621 = vpop.xlane.xlu0 %620
        %622 = vadd.xlane.f32.xlu0 %v562
        %v623 = vpop.xlane.xlu0 %622
        %624 = vadd.xlane.f32.xlu0 %v563
        %v625 = vpop.xlane.xlu0 %624
        %626 = vadd.xlane.f32.xlu0 %v564
        %v627 = vpop.xlane.xlu0 %626
        %628 = vadd.xlane.f32.xlu0 %v565
        %v629 = vpop.xlane.xlu0 %628
        %v630 = vrsqrt.pop %v567
        %v631 = vmul.f32 %v567, %v630
        %vm632 = vcmp.eq.f32.partialorder %v567, inf
        %v633 = vsel %vm632, %v567, %v631
        %vm634 = vcmp.eq.f32.partialorder %v567, 0.0
        %v635 = vand.u32 %v567, 2147483648
        %v636 = vsel %vm634, %v635, %v633
        %v637 = vrsqrt.pop %v569
        %v638 = vmul.f32 %v569, %v637
        %vm639 = vcmp.eq.f32.partialorder %v569, inf
        %v640 = vsel %vm639, %v569, %v638
        %vm641 = vcmp.eq.f32.partialorder %v569, 0.0
        %v642 = vand.u32 %v569, 2147483648
        %v643 = vsel %vm641, %v642, %v640
        %v644 = vrsqrt.pop %v571
        %v645 = vmul.f32 %v571, %v644
        %vm646 = vcmp.eq.f32.partialorder %v571, inf
        %v647 = vsel %vm646, %v571, %v645
        %vm648 = vcmp.eq.f32.partialorder %v571, 0.0
        %v649 = vand.u32 %v571, 2147483648
        %v650 = vsel %vm648, %v649, %v647
        %v651 = vrsqrt.pop %v573
        %v652 = vmul.f32 %v573, %v651
        %vm653 = vcmp.eq.f32.partialorder %v573, inf
        %v654 = vsel %vm653, %v573, %v652
        %vm655 = vcmp.eq.f32.partialorder %v573, 0.0
        %v656 = vand.u32 %v573, 2147483648
        %v657 = vsel %vm655, %v656, %v654
        %v658 = vrsqrt.pop %v575
        %v659 = vmul.f32 %v575, %v658
        %vm660 = vcmp.eq.f32.partialorder %v575, inf
        %v661 = vsel %vm660, %v575, %v659
        %vm662 = vcmp.eq.f32.partialorder %v575, 0.0
        %v663 = vand.u32 %v575, 2147483648
        %v664 = vsel %vm662, %v663, %v661
        %v665 = vrsqrt.pop %v577
        %v666 = vmul.f32 %v577, %v665
        %vm667 = vcmp.eq.f32.partialorder %v577, inf
        %v668 = vsel %vm667, %v577, %v666
        %vm669 = vcmp.eq.f32.partialorder %v577, 0.0
        %v670 = vand.u32 %v577, 2147483648
        %v671 = vsel %vm669, %v670, %v668
        %v672 = vrsqrt.pop %v579
        %v673 = vmul.f32 %v579, %v672
        %vm674 = vcmp.eq.f32.partialorder %v579, inf
        %v675 = vsel %vm674, %v579, %v673
        %vm676 = vcmp.eq.f32.partialorder %v579, 0.0
        %v677 = vand.u32 %v579, 2147483648
        %v678 = vsel %vm676, %v677, %v675
        %v679 = vrsqrt.pop %v581
        %v680 = vmul.f32 %v581, %v679
        %vm681 = vcmp.eq.f32.partialorder %v581, inf
        %v682 = vsel %vm681, %v581, %v680
        %vm683 = vcmp.eq.f32.partialorder %v581, 0.0
        %v684 = vand.u32 %v581, 2147483648
        %v685 = vsel %vm683, %v684, %v682
        %v686 = vrsqrt.pop %v583
        %v687 = vmul.f32 %v583, %v686
        %vm688 = vcmp.eq.f32.partialorder %v583, inf
        %v689 = vsel %vm688, %v583, %v687
        %vm690 = vcmp.eq.f32.partialorder %v583, 0.0
        %v691 = vand.u32 %v583, 2147483648
        %v692 = vsel %vm690, %v691, %v689
        %v693 = vrsqrt.pop %v585
        %v694 = vmul.f32 %v585, %v693
        %vm695 = vcmp.eq.f32.partialorder %v585, inf
        %v696 = vsel %vm695, %v585, %v694
        %vm697 = vcmp.eq.f32.partialorder %v585, 0.0
        %v698 = vand.u32 %v585, 2147483648
        %v699 = vsel %vm697, %v698, %v696
        %v700 = vrsqrt.pop %v587
        %v701 = vmul.f32 %v587, %v700
        %vm702 = vcmp.eq.f32.partialorder %v587, inf
        %v703 = vsel %vm702, %v587, %v701
        %vm704 = vcmp.eq.f32.partialorder %v587, 0.0
        %v705 = vand.u32 %v587, 2147483648
        %v706 = vsel %vm704, %v705, %v703
        %v707 = vrsqrt.pop %v589
        %v708 = vmul.f32 %v589, %v707
        %vm709 = vcmp.eq.f32.partialorder %v589, inf
        %v710 = vsel %vm709, %v589, %v708
        %vm711 = vcmp.eq.f32.partialorder %v589, 0.0
        %v712 = vand.u32 %v589, 2147483648
        %v713 = vsel %vm711, %v712, %v710
        %v714 = vrsqrt.pop %v591
        %v715 = vmul.f32 %v591, %v714
        %vm716 = vcmp.eq.f32.partialorder %v591, inf
        %v717 = vsel %vm716, %v591, %v715
        %vm718 = vcmp.eq.f32.partialorder %v591, 0.0
        %v719 = vand.u32 %v591, 2147483648
        %v720 = vsel %vm718, %v719, %v717
        %v721 = vrsqrt.pop %v593
        %v722 = vmul.f32 %v593, %v721
        %vm723 = vcmp.eq.f32.partialorder %v593, inf
        %v724 = vsel %vm723, %v593, %v722
        %vm725 = vcmp.eq.f32.partialorder %v593, 0.0
        %v726 = vand.u32 %v593, 2147483648
        %v727 = vsel %vm725, %v726, %v724
        %v728 = vrsqrt.pop %v595
        %v729 = vmul.f32 %v595, %v728
        %vm730 = vcmp.eq.f32.partialorder %v595, inf
        %v731 = vsel %vm730, %v595, %v729
        %vm732 = vcmp.eq.f32.partialorder %v595, 0.0
        %v733 = vand.u32 %v595, 2147483648
        %v734 = vsel %vm732, %v733, %v731
        %v735 = vrsqrt.pop %v597
        %v736 = vmul.f32 %v597, %v735
        %vm737 = vcmp.eq.f32.partialorder %v597, inf
        %v738 = vsel %vm737, %v597, %v736
        %vm739 = vcmp.eq.f32.partialorder %v597, 0.0
        %v740 = vand.u32 %v597, 2147483648
        %v741 = vsel %vm739, %v740, %v738
        %v742 = vrsqrt.pop %v599
        %v743 = vmul.f32 %v599, %v742
        %vm744 = vcmp.eq.f32.partialorder %v599, inf
        %v745 = vsel %vm744, %v599, %v743
        %vm746 = vcmp.eq.f32.partialorder %v599, 0.0
        %v747 = vand.u32 %v599, 2147483648
        %v748 = vsel %vm746, %v747, %v745
        %v749 = vrsqrt.pop %v601
        %v750 = vmul.f32 %v601, %v749
        %vm751 = vcmp.eq.f32.partialorder %v601, inf
        %v752 = vsel %vm751, %v601, %v750
        %vm753 = vcmp.eq.f32.partialorder %v601, 0.0
        %v754 = vand.u32 %v601, 2147483648
        %v755 = vsel %vm753, %v754, %v752
        %v756 = vrsqrt.pop %v603
        %v757 = vmul.f32 %v603, %v756
        %vm758 = vcmp.eq.f32.partialorder %v603, inf
        %v759 = vsel %vm758, %v603, %v757
        %vm760 = vcmp.eq.f32.partialorder %v603, 0.0
        %v761 = vand.u32 %v603, 2147483648
        %v762 = vsel %vm760, %v761, %v759
        %v763 = vrsqrt.pop %v605
        %v764 = vmul.f32 %v605, %v763
        %vm765 = vcmp.eq.f32.partialorder %v605, inf
        %v766 = vsel %vm765, %v605, %v764
        %vm767 = vcmp.eq.f32.partialorder %v605, 0.0
        %v768 = vand.u32 %v605, 2147483648
        %v769 = vsel %vm767, %v768, %v766
        %v770 = vrsqrt.pop %v607
        %v771 = vmul.f32 %v607, %v770
        %vm772 = vcmp.eq.f32.partialorder %v607, inf
        %v773 = vsel %vm772, %v607, %v771
        %vm774 = vcmp.eq.f32.partialorder %v607, 0.0
        %v775 = vand.u32 %v607, 2147483648
        %v776 = vsel %vm774, %v775, %v773
        %v777 = vrsqrt.pop %v609
        %v778 = vmul.f32 %v609, %v777
        %vm779 = vcmp.eq.f32.partialorder %v609, inf
        %v780 = vsel %vm779, %v609, %v778
        %vm781 = vcmp.eq.f32.partialorder %v609, 0.0
        %v782 = vand.u32 %v609, 2147483648
        %v783 = vsel %vm781, %v782, %v780
        %v784 = vrsqrt.pop %v611
        %v785 = vmul.f32 %v611, %v784
        %vm786 = vcmp.eq.f32.partialorder %v611, inf
        %v787 = vsel %vm786, %v611, %v785
        %vm788 = vcmp.eq.f32.partialorder %v611, 0.0
        %v789 = vand.u32 %v611, 2147483648
        %v790 = vsel %vm788, %v789, %v787
        %v791 = vrsqrt.pop %v613
        %v792 = vmul.f32 %v613, %v791
        %vm793 = vcmp.eq.f32.partialorder %v613, inf
        %v794 = vsel %vm793, %v613, %v792
        %vm795 = vcmp.eq.f32.partialorder %v613, 0.0
        %v796 = vand.u32 %v613, 2147483648
        %v797 = vsel %vm795, %v796, %v794
        %v798 = vrsqrt.pop %v615
        %v799 = vmul.f32 %v615, %v798
        %vm800 = vcmp.eq.f32.partialorder %v615, inf
        %v801 = vsel %vm800, %v615, %v799
        %vm802 = vcmp.eq.f32.partialorder %v615, 0.0
        %v803 = vand.u32 %v615, 2147483648
        %v804 = vsel %vm802, %v803, %v801
        %v805 = vrsqrt.pop %v617
        %v806 = vmul.f32 %v617, %v805
        %vm807 = vcmp.eq.f32.partialorder %v617, inf
        %v808 = vsel %vm807, %v617, %v806
        %vm809 = vcmp.eq.f32.partialorder %v617, 0.0
        %v810 = vand.u32 %v617, 2147483648
        %v811 = vsel %vm809, %v810, %v808
        %v812 = vrsqrt.pop %v619
        %v813 = vmul.f32 %v619, %v812
        %vm814 = vcmp.eq.f32.partialorder %v619, inf
        %v815 = vsel %vm814, %v619, %v813
        %vm816 = vcmp.eq.f32.partialorder %v619, 0.0
        %v817 = vand.u32 %v619, 2147483648
        %v818 = vsel %vm816, %v817, %v815
        %v819 = vrsqrt.pop %v621
        %v820 = vmul.f32 %v621, %v819
        %vm821 = vcmp.eq.f32.partialorder %v621, inf
        %v822 = vsel %vm821, %v621, %v820
        %vm823 = vcmp.eq.f32.partialorder %v621, 0.0
        %v824 = vand.u32 %v621, 2147483648
        %v825 = vsel %vm823, %v824, %v822
        %v826 = vrsqrt.pop %v623
        %v827 = vmul.f32 %v623, %v826
        %vm828 = vcmp.eq.f32.partialorder %v623, inf
        %v829 = vsel %vm828, %v623, %v827
        %vm830 = vcmp.eq.f32.partialorder %v623, 0.0
        %v831 = vand.u32 %v623, 2147483648
        %v832 = vsel %vm830, %v831, %v829
        %v833 = vrsqrt.pop %v625
        %v834 = vmul.f32 %v625, %v833
        %vm835 = vcmp.eq.f32.partialorder %v625, inf
        %v836 = vsel %vm835, %v625, %v834
        %vm837 = vcmp.eq.f32.partialorder %v625, 0.0
        %v838 = vand.u32 %v625, 2147483648
        %v839 = vsel %vm837, %v838, %v836
        %v840 = vrsqrt.pop %v627
        %v841 = vmul.f32 %v627, %v840
        %vm842 = vcmp.eq.f32.partialorder %v627, inf
        %v843 = vsel %vm842, %v627, %v841
        %vm844 = vcmp.eq.f32.partialorder %v627, 0.0
        %v845 = vand.u32 %v627, 2147483648
        %v846 = vsel %vm844, %v845, %v843
        %v847 = vrsqrt.pop %v629
        %v848 = vmul.f32 %v629, %v847
        %vm849 = vcmp.eq.f32.partialorder %v629, inf
        %v850 = vsel %vm849, %v629, %v848
        %vm851 = vcmp.eq.f32.partialorder %v629, 0.0
        %v852 = vand.u32 %v629, 2147483648
        %v853 = vsel %vm851, %v852, %v850
        %v854 = vmax.f32 %v636, 1e-12
        %v855 = vmax.f32 %v643, 1e-12
        %v856 = vmax.f32 %v650, 1e-12
        %v857 = vmax.f32 %v657, 1e-12
        %v858 = vmax.f32 %v664, 1e-12
        %v859 = vmax.f32 %v671, 1e-12
        %v860 = vmax.f32 %v678, 1e-12
        %v861 = vmax.f32 %v685, 1e-12
        %v862 = vmax.f32 %v692, 1e-12
        %v863 = vmax.f32 %v699, 1e-12
        %v864 = vmax.f32 %v706, 1e-12
        %v865 = vmax.f32 %v713, 1e-12
        %v866 = vmax.f32 %v720, 1e-12
        %v867 = vmax.f32 %v727, 1e-12
        %v868 = vmax.f32 %v734, 1e-12
        %v869 = vmax.f32 %v741, 1e-12
        %v870 = vmax.f32 %v748, 1e-12
        %v871 = vmax.f32 %v755, 1e-12
        %v872 = vmax.f32 %v762, 1e-12
        %v873 = vmax.f32 %v769, 1e-12
        %v874 = vmax.f32 %v776, 1e-12
        %v875 = vmax.f32 %v783, 1e-12
        %v876 = vmax.f32 %v790, 1e-12
        %v877 = vmax.f32 %v797, 1e-12
        %v878 = vmax.f32 %v804, 1e-12
        %v879 = vmax.f32 %v811, 1e-12
        %v880 = vmax.f32 %v818, 1e-12
        %v881 = vmax.f32 %v825, 1e-12
        %v882 = vmax.f32 %v832, 1e-12
        %v883 = vmax.f32 %v839, 1e-12
        %v884 = vmax.f32 %v846, 1e-12
        %v885 = vmax.f32 %v853, 1e-12
        %v886 = vrcp.pop %v854
        %v887 = vmul.f32 %v376, %v886
        %v888 = vrcp.pop %v855
        %v889 = vmul.f32 %v381, %v888
        %v890 = vrcp.pop %v856
        %v891 = vmul.f32 %v386, %v890
        %v892 = vrcp.pop %v857
        %v893 = vmul.f32 %v391, %v892
        %v894 = vrcp.pop %v858
        %v895 = vmul.f32 %v396, %v894
        %v896 = vrcp.pop %v859
        %v897 = vmul.f32 %v401, %v896
        %v898 = vrcp.pop %v860
        %v899 = vmul.f32 %v406, %v898
        %v900 = vrcp.pop %v861
        %v901 = vmul.f32 %v411, %v900
        %v902 = vrcp.pop %v862
        %v903 = vmul.f32 %v416, %v902
        %v904 = vrcp.pop %v863
        %v905 = vmul.f32 %v421, %v904
        %v906 = vrcp.pop %v864
        %v907 = vmul.f32 %v426, %v906
        %v908 = vrcp.pop %v865
        %v909 = vmul.f32 %v431, %v908
        %v910 = vrcp.pop %v866
        %v911 = vmul.f32 %v436, %v910
        %v912 = vrcp.pop %v867
        %v913 = vmul.f32 %v441, %v912
        %v914 = vrcp.pop %v868
        %v915 = vmul.f32 %v446, %v914
        %v916 = vrcp.pop %v869
        %v917 = vmul.f32 %v451, %v916
        %v918 = vrcp.pop %v870
        %v919 = vmul.f32 %v456, %v918
        %v920 = vrcp.pop %v871
        %v921 = vmul.f32 %v461, %v920
        %v922 = vrcp.pop %v872
        %v923 = vmul.f32 %v466, %v922
        %v924 = vrcp.pop %v873
        %v925 = vmul.f32 %v471, %v924
        %v926 = vrcp.pop %v874
        %v927 = vmul.f32 %v476, %v926
        %v928 = vrcp.pop %v875
        %v929 = vmul.f32 %v481, %v928
        %v930 = vrcp.pop %v876
        %v931 = vmul.f32 %v486, %v930
        %v932 = vrcp.pop %v877
        %v933 = vmul.f32 %v491, %v932
        %v934 = vrcp.pop %v878
        %v935 = vmul.f32 %v496, %v934
        %v936 = vrcp.pop %v879
        %v937 = vmul.f32 %v501, %v936
        %v938 = vrcp.pop %v880
        %v939 = vmul.f32 %v506, %v938
        %v940 = vrcp.pop %v881
        %v941 = vmul.f32 %v511, %v940
        %v942 = vrcp.pop %v882
        %v943 = vmul.f32 %v516, %v942
        %v944 = vrcp.pop %v883
        %v945 = vmul.f32 %v521, %v944
        %v946 = vrcp.pop %v884
        %v947 = vmul.f32 %v526, %v946
        %v948 = vrcp.pop %v885
        %v949 = vmul.f32 %v531, %v948
        %v950 = vpack.c.bf16 %v889, %v887
        %v951 = vpack.c.bf16 %v893, %v891
        %v952 = vpack.c.bf16 %v897, %v895
        %v953 = vpack.c.bf16 %v901, %v899
        %v954 = vpack.c.bf16 %v905, %v903
        %v955 = vpack.c.bf16 %v909, %v907
        %v956 = vpack.c.bf16 %v913, %v911
        %v957 = vpack.c.bf16 %v917, %v915
        %v958 = vpack.c.bf16 %v921, %v919
        %v959 = vpack.c.bf16 %v925, %v923
        %v960 = vpack.c.bf16 %v929, %v927
        %v961 = vpack.c.bf16 %v933, %v931
        %v962 = vpack.c.bf16 %v937, %v935
        %v963 = vpack.c.bf16 %v941, %v939
        %v964 = vpack.c.bf16 %v945, %v943
        %v965 = vpack.c.bf16 %v949, %v947
        %v982 = vunpack.c.l.b16 %v950
        %v983 = vunpack.c.h.b16 %v950
        %v984 = vunpack.c.l.b16 %v951
        %v985 = vunpack.c.h.b16 %v951
        %v986 = vunpack.c.l.b16 %v952
        %v987 = vunpack.c.h.b16 %v952
        %v988 = vunpack.c.l.b16 %v953
        %v989 = vunpack.c.h.b16 %v953
        %v990 = vunpack.c.l.b16 %v954
        %v991 = vunpack.c.h.b16 %v954
        %v992 = vunpack.c.l.b16 %v955
        %v993 = vunpack.c.h.b16 %v955
        %v994 = vunpack.c.l.b16 %v956
        %v995 = vunpack.c.h.b16 %v956
        %v996 = vunpack.c.l.b16 %v957
        %v997 = vunpack.c.h.b16 %v957
        %v998 = vunpack.c.l.b16 %v958
        %v999 = vunpack.c.h.b16 %v958
        %v1000 = vunpack.c.l.b16 %v959
        %v1001 = vunpack.c.h.b16 %v959
        %v1002 = vunpack.c.l.b16 %v960
        %v1003 = vunpack.c.h.b16 %v960
        %v1004 = vunpack.c.l.b16 %v961
        %v1005 = vunpack.c.h.b16 %v961
        %v1006 = vunpack.c.l.b16 %v962
        %v1007 = vunpack.c.h.b16 %v962
        %v1008 = vunpack.c.l.b16 %v963
        %v1009 = vunpack.c.h.b16 %v963
        %v1010 = vunpack.c.l.b16 %v964
        %v1011 = vunpack.c.h.b16 %v964
        %v1012 = vunpack.c.l.b16 %v965
        %v1013 = vunpack.c.h.b16 %v965
        %v1014 = vpack.c.b16 %v982, %v982
        %v1015 = vpack.c.b16 %v983, %v983
        %v1016 = vpack.c.b16 %v984, %v984
        %v1017 = vpack.c.b16 %v985, %v985
        %v1018 = vpack.c.b16 %v986, %v986
        %v1019 = vpack.c.b16 %v987, %v987
        %v1020 = vpack.c.b16 %v988, %v988
        %v1021 = vpack.c.b16 %v989, %v989
        %v1022 = vpack.c.b16 %v990, %v990
        %v1023 = vpack.c.b16 %v991, %v991
        %v1024 = vpack.c.b16 %v992, %v992
        %v1025 = vpack.c.b16 %v993, %v993
        %v1026 = vpack.c.b16 %v994, %v994
        %v1027 = vpack.c.b16 %v995, %v995
        %v1028 = vpack.c.b16 %v996, %v996
        %v1029 = vpack.c.b16 %v997, %v997
        %v1030 = vpack.c.b16 %v998, %v998
        %v1031 = vpack.c.b16 %v999, %v999
        %v1032 = vpack.c.b16 %v1000, %v1000
        %v1033 = vpack.c.b16 %v1001, %v1001
        %v1034 = vpack.c.b16 %v1002, %v1002
        %v1035 = vpack.c.b16 %v1003, %v1003
        %v1036 = vpack.c.b16 %v1004, %v1004
        %v1037 = vpack.c.b16 %v1005, %v1005
        %v1038 = vpack.c.b16 %v1006, %v1006
        %v1039 = vpack.c.b16 %v1007, %v1007
        %v1040 = vpack.c.b16 %v1008, %v1008
        %v1041 = vpack.c.b16 %v1009, %v1009
        %v1042 = vpack.c.b16 %v1010, %v1010
        %v1043 = vpack.c.b16 %v1011, %v1011
        %v1044 = vpack.c.b16 %v1012, %v1012
        %v1045 = vpack.c.b16 %v1013, %v1013
        %1078 = vst [vmem:[%s164] sm:$0xf] %v1014
        %1079 = vst [vmem:[%s164 + $0x4] sm:$0xf] %v1015
        %1080 = vst [vmem:[%s164 + $0x8] sm:$0xf] %v1016
        %1081 = vst [vmem:[%s164 + $0xc] sm:$0xf] %v1017
        %1082 = vst [vmem:[%s164 + $0x10] sm:$0xf] %v1018
        %1083 = vst [vmem:[%s164 + $0x14] sm:$0xf] %v1019
        %1084 = vst [vmem:[%s164 + $0x18] sm:$0xf] %v1020
        %1085 = vst [vmem:[%s164 + $0x1c] sm:$0xf] %v1021
        %1086 = vst [vmem:[%s164 + $0x20] sm:$0xf] %v1022
        %1087 = vst [vmem:[%s164 + $0x24] sm:$0xf] %v1023
        %1088 = vst [vmem:[%s164 + $0x28] sm:$0xf] %v1024
        %1089 = vst [vmem:[%s164 + $0x2c] sm:$0xf] %v1025
        %1090 = vst [vmem:[%s164 + $0x30] sm:$0xf] %v1026
        %1091 = vst [vmem:[%s164 + $0x34] sm:$0xf] %v1027
        %1092 = vst [vmem:[%s164 + $0x38] sm:$0xf] %v1028
        %1093 = vst [vmem:[%s164 + $0x3c] sm:$0xf] %v1029
        %1094 = vst [vmem:[%s164 + $0x40] sm:$0xf] %v1030
        %1095 = vst [vmem:[%s164 + $0x44] sm:$0xf] %v1031
        %1096 = vst [vmem:[%s164 + $0x48] sm:$0xf] %v1032
        %1097 = vst [vmem:[%s164 + $0x4c] sm:$0xf] %v1033
        %1098 = vst [vmem:[%s164 + $0x50] sm:$0xf] %v1034
        %1099 = vst [vmem:[%s164 + $0x54] sm:$0xf] %v1035
        %1100 = vst [vmem:[%s164 + $0x58] sm:$0xf] %v1036
        %1101 = vst [vmem:[%s164 + $0x5c] sm:$0xf] %v1037
        %1102 = vst [vmem:[%s164 + $0x60] sm:$0xf] %v1038
        %1103 = vst [vmem:[%s164 + $0x64] sm:$0xf] %v1039
        %1104 = vst [vmem:[%s164 + $0x68] sm:$0xf] %v1040
        %1105 = vst [vmem:[%s164 + $0x6c] sm:$0xf] %v1041
        %1106 = vst [vmem:[%s164 + $0x70] sm:$0xf] %v1042
        %1107 = vst [vmem:[%s164 + $0x74] sm:$0xf] %v1043
        %1108 = vst [vmem:[%s164 + $0x78] sm:$0xf] %v1044
        %1109 = vst [vmem:[%s164 + $0x7c] sm:$0xf] %v1045
        %s1110 = sand.u32 %s93, 1
        %s1111 = scalar_lea.sflag [#allocation3], %s1110
        %s1112 = sand.u32 %s93, 1
        %s1113 = smul.addr %s1112, 128
        %s1114 = scalar_lea.vmem [#allocation2], %s1113
        // Predicated region
        $region33: #{tpu_custom_call.1} parent=31 // pred_check
          %p1115 = pneg %p103
        $region34: #{tpu_custom_call.1} parent=31 // pred_check_branch
          %1117 = sbr.rel (%p1115) target = $region36
        $region35: #{tpu_custom_call.1} parent=31 // pred_region
          %s1118 = smul.u32 32, %s17
          %s1120 = ssub.s32 2048, 2048
          %1121 = vsyncadd %s1111, %s1120
          %s1122 = smul.addr %s1118, 64
          %s1123 = scalar_lea.hbm %s3, %s1122
          %s1124 = sshll.u32 %s1114, 4
          %s1125 = int_to_ptr.vmem [resolvable:$true] %s1124
          %1130 = dma.vmem_to_hbm [thread:$0]  %s1125, 2048, %s1123, %s1111, 64, 64, 4
        $region36: #{tpu_custom_call.1} parent=31 // pred_fallthru
          _
      $region32: #{tpu_custom_call.1} parent=5 // pred_fallthru
        _
      %p1131 = scmp.le.s32.totalorder 2, %s12
      // Predicated region
      $region37: #{tpu_custom_call.1} parent=5 // pred_check
        %p1132 = pneg %p1131
      $region38: #{tpu_custom_call.1} parent=5 // pred_check_branch
        %1134 = sbr.rel (%p1132) target = $region40
      $region39: #{tpu_custom_call.1} parent=5 // pred_region
        %s1135 = ssub.s32 %s12, 2
        // Predicated region
        $region41: #{tpu_custom_call.1} parent=39 // pred_check
          %p1136 = pneg %p109
        $region42: #{tpu_custom_call.1} parent=39 // pred_check_branch
          %1138 = sbr.rel (%p1136) target = $region44
        $region43: #{tpu_custom_call.1} parent=39 // pred_region
          %s1139 = sand.u32 %s94, 1
          %s1140 = scalar_lea.sflag [#allocation3], %s1139
          %s1141 = sand.u32 %s94, 1
          %s1142 = smul.addr %s1141, 128
          %s1143 = scalar_lea.vmem [#allocation2], %s1142
          %1144 = dma.done %s1140, 2048
        $region44: #{tpu_custom_call.1} parent=39 // pred_fallthru
          _
      $region40: #{tpu_custom_call.1} parent=5 // pred_fallthru
        _
    $region6: #{tpu_custom_call.1} parent=1 // loop_footer
      %s16 = sadd.s32 1, %s12
    $region7: #{tpu_custom_call.1} parent=1 // loop_footer_branch
      %11 = sbr.rel target = $region3
    $region8: #{tpu_custom_call.1} parent=1 // loop_exit
      _
    %1145 = vsyncpa [#allocation3], 1
    %s1146 = scalar_lea.sflag [#allocation3], 1
    %1147 = vsyncpa %s1146, 1

</llo_original>
